<compile_context>
chip_gen: v7x
topology: tpu7x:2x2x1
jax: 0.10.0
libtpu: 0.0.40
codegen_flags: <defaults>
</compile_context>

<pallas_src>
import functools

import jax
import jax.numpy as jnp
from jax.experimental import pallas as pl
from jax.experimental.pallas import tpu as pltpu


def critic_kernel(state_ref, action_ref, w_ref, b_ref, q_ref, *,
                  state_dim, action_dim):
    s = state_ref[...]                      # (B, S) f32
    a = action_ref[...]                     # (B, A) f32

    w1 = w_ref[0]                           # (H, H): rows [0:S] state part,
                                            #         rows [S:S+A] action part
    w2 = w_ref[1]                           # (H, H)
    wq = w_ref[2]                           # (H, H): only column 0 is live

    b1 = b_ref[0]                           # (1, H)
    b2 = b_ref[1]                           # (1, H)
    bq = b_ref[2]                           # (1, H): only lane 0 is live

    # layer1: x @ W1 with x = concat(state, action) realized implicitly as two
    # matmuls against static row-slices of the packed W1 (no concat needed).
    h = jnp.dot(s, w1[:state_dim, :], preferred_element_type=jnp.float32)
    h = h + jnp.dot(a, w1[state_dim:state_dim + action_dim, :],
                    preferred_element_type=jnp.float32)
    h = jnp.maximum(h + b1, 0.0)            # ReLU

    # layer2
    h = jnp.dot(h, w2, preferred_element_type=jnp.float32) + b2
    h = jnp.maximum(h, 0.0)                 # ReLU

    # Q head (output padded to H lanes inside the MXU; only lane 0 is real)
    q = jnp.dot(h, wq, preferred_element_type=jnp.float32) + bq
    q_ref[...] = q[:, 0:1].astype(q_ref.dtype)


@jax.jit
def critic_forward(state, action, w_stack, b_stack):
    """state: (B, S) f32, action: (B, A) f32 -> Q value (B, 1) f32."""
    B, S = state.shape
    A = action.shape[1]
    vmem = pl.BlockSpec(memory_space=pltpu.MemorySpace.VMEM)
    return pl.pallas_call(
        functools.partial(critic_kernel, state_dim=S, action_dim=A),
        out_shape=jax.ShapeDtypeStruct((B, 1), jnp.float32),
        in_specs=[vmem, vmem, vmem, vmem],
        out_specs=vmem,
    )(state, action, w_stack, b_stack)


def init_params(key, state_dim, action_dim, hidden):
    """PyTorch-Linear-style uniform init.  Weights stored (in, out)."""
    dims = [
        (state_dim + action_dim, hidden),   # layer1
        (hidden, hidden),                   # layer2
        (hidden, 1),                        # Q
    ]
    params = []
    for fan_in, fan_out in dims:
        key, kw, kb = jax.random.split(key, 3)
        bound = 1.0 / jnp.sqrt(fan_in)
        w = jax.random.uniform(kw, (fan_in, fan_out), jnp.float32, -bound, bound)
        b = jax.random.uniform(kb, (fan_out,), jnp.float32, -bound, bound)
        params.append((w, b))
    return params


def pack_params(params, hidden):
    """Pack the 3 Linear layers into one (3,H,H) weight stack + (3,1,H) bias stack.

    Done once, outside the hot path, so the kernel sees exactly two parameter
    operands regardless of layer count.
    """
    (w1, b1), (w2, b2), (wq, bq) = params
    H = hidden
    in_dim = w1.shape[0]
    assert in_dim <= H, "packing assumes state_dim + action_dim <= layer_neurons"

    w1p = jnp.zeros((H, H), jnp.float32).at[:in_dim, :].set(w1)
    wqp = jnp.zeros((H, H), jnp.float32).at[:, 0:1].set(wq)
    w_stack = jnp.stack([w1p, w2, wqp])                         # (3, H, H)

    b1p = b1.reshape(1, H)
    b2p = b2.reshape(1, H)
    bqp = jnp.zeros((1, H), jnp.float32).at[0, 0].set(bq[0])
    b_stack = jnp.stack([b1p, b2p, bqp])                        # (3, 1, H)
    return w_stack, b_stack


def reference_forward(state, action, params):
    """Pure-JAX replica of Critic.forward (torch: Linear/ReLU/Linear/ReLU/Linear)."""
    (w1, b1), (w2, b2), (wq, bq) = params
    x = jnp.concatenate([state, action], axis=1)
    x = jnp.maximum(x @ w1 + b1, 0.0)
    x = jnp.maximum(x @ w2 + b2, 0.0)
    return x @ wq + bq


# TODO(synk): save/load_network_weights and the Adam optimizer are training
# utilities, not part of the forward pass, so they are not translated.

if __name__ == "__main__":
    B, STATE_DIM, ACTION_DIM, HIDDEN = 8, 16, 4, 32

    key = jax.random.PRNGKey(0)
    key, ks, ka, kp = jax.random.split(key, 4)
    state = jax.random.normal(ks, (B, STATE_DIM), jnp.float32)
    action = jax.random.normal(ka, (B, ACTION_DIM), jnp.float32)
    params = init_params(kp, STATE_DIM, ACTION_DIM, HIDDEN)

    w_stack, b_stack = pack_params(params, HIDDEN)

    q = critic_forward(state, action, w_stack, b_stack)
    jax.block_until_ready(q)

    q_ref = reference_forward(state, action, params)
    assert q.shape == (B, 1)
    assert jnp.allclose(q, q_ref, atol=1e-5, rtol=1e-5)

    print("KERNEL_OK")
</pallas_src>

<mosaic_0001>
module attributes {stable_mosaic.version = 11 : i64} {
  func.func @critic_kernel(%arg0: memref<8x16xf32, #tpu.memory_space<vmem>>, %arg1: memref<8x4xf32, #tpu.memory_space<vmem>>, %arg2: memref<3x32x32xf32, #tpu.memory_space<vmem>>, %arg3: memref<3x1x32xf32, #tpu.memory_space<vmem>>, %arg4: memref<8x1xf32, #tpu.memory_space<vmem>>) attributes {dimension_semantics = [], scalar_prefetch = 0 : i64, scratch_operands = 0 : i64, tpu.core_type = #tpu.core_type<tc>} {
    %c0 = arith.constant 0 : index
    %c0_0 = arith.constant 0 : index
    %0 = vector.load %arg0[%c0, %c0_0] : memref<8x16xf32, #tpu.memory_space<vmem>>, vector<8x16xf32>
    %c0_1 = arith.constant 0 : index
    %c0_2 = arith.constant 0 : index
    %1 = vector.load %arg1[%c0_1, %c0_2] : memref<8x4xf32, #tpu.memory_space<vmem>>, vector<8x4xf32>
    %c0_3 = arith.constant 0 : index
    %c0_4 = arith.constant 0 : index
    %c0_5 = arith.constant 0 : index
    %2 = vector.load %arg2[%c0_3, %c0_4, %c0_5] : memref<3x32x32xf32, #tpu.memory_space<vmem>>, vector<1x32x32xf32>
    %3 = vector.shape_cast %2 : vector<1x32x32xf32> to vector<32x32xf32>
    %c1 = arith.constant 1 : index
    %c0_6 = arith.constant 0 : index
    %c0_7 = arith.constant 0 : index
    %4 = vector.load %arg2[%c1, %c0_6, %c0_7] : memref<3x32x32xf32, #tpu.memory_space<vmem>>, vector<1x32x32xf32>
    %5 = vector.shape_cast %4 : vector<1x32x32xf32> to vector<32x32xf32>
    %c2 = arith.constant 2 : index
    %c0_8 = arith.constant 0 : index
    %c0_9 = arith.constant 0 : index
    %6 = vector.load %arg2[%c2, %c0_8, %c0_9] : memref<3x32x32xf32, #tpu.memory_space<vmem>>, vector<1x32x32xf32>
    %7 = vector.shape_cast %6 : vector<1x32x32xf32> to vector<32x32xf32>
    %c0_10 = arith.constant 0 : index
    %c0_11 = arith.constant 0 : index
    %c0_12 = arith.constant 0 : index
    %8 = vector.load %arg3[%c0_10, %c0_11, %c0_12] : memref<3x1x32xf32, #tpu.memory_space<vmem>>, vector<1x1x32xf32>
    %9 = vector.shape_cast %8 : vector<1x1x32xf32> to vector<1x32xf32>
    %c1_13 = arith.constant 1 : index
    %c0_14 = arith.constant 0 : index
    %c0_15 = arith.constant 0 : index
    %10 = vector.load %arg3[%c1_13, %c0_14, %c0_15] : memref<3x1x32xf32, #tpu.memory_space<vmem>>, vector<1x1x32xf32>
    %11 = vector.shape_cast %10 : vector<1x1x32xf32> to vector<1x32xf32>
    %c2_16 = arith.constant 2 : index
    %c0_17 = arith.constant 0 : index
    %c0_18 = arith.constant 0 : index
    %12 = vector.load %arg3[%c2_16, %c0_17, %c0_18] : memref<3x1x32xf32, #tpu.memory_space<vmem>>, vector<1x1x32xf32>
    %13 = vector.shape_cast %12 : vector<1x1x32xf32> to vector<1x32xf32>
    %14 = vector.extract_strided_slice %3 {offsets = [0, 0], sizes = [16, 32], strides = [1, 1]} : vector<32x32xf32> to vector<16x32xf32>
    %cst = arith.constant dense<0.000000e+00> : vector<8x32xf32>
    %15 = tpu.matmul %0, %14, %cst {dimension_numbers = #tpu.dot_dimension_numbers<[1], [0], [0], [1], [0, 0, 1, 1], [], []>} : vector<8x16xf32>, vector<16x32xf32>, vector<8x32xf32> -> vector<8x32xf32>
    %16 = vector.extract_strided_slice %3 {offsets = [16, 0], sizes = [4, 32], strides = [1, 1]} : vector<32x32xf32> to vector<4x32xf32>
    %cst_19 = arith.constant dense<0.000000e+00> : vector<8x32xf32>
    %17 = tpu.matmul %1, %16, %cst_19 {dimension_numbers = #tpu.dot_dimension_numbers<[1], [0], [0], [1], [0, 0, 1, 1], [], []>} : vector<8x4xf32>, vector<4x32xf32>, vector<8x32xf32> -> vector<8x32xf32>
    %18 = arith.addf %15, %17 : vector<8x32xf32>
    %19 = vector.broadcast %9 : vector<1x32xf32> to vector<8x32xf32>
    %20 = arith.addf %18, %19 : vector<8x32xf32>
    %cst_20 = arith.constant 0.000000e+00 : f32
    %21 = vector.broadcast %cst_20 : f32 to vector<8x32xf32>
    %22 = arith.maximumf %20, %21 : vector<8x32xf32>
    %cst_21 = arith.constant dense<0.000000e+00> : vector<8x32xf32>
    %23 = tpu.matmul %22, %5, %cst_21 {dimension_numbers = #tpu.dot_dimension_numbers<[1], [0], [0], [1], [0, 0, 1, 1], [], []>} : vector<8x32xf32>, vector<32x32xf32>, vector<8x32xf32> -> vector<8x32xf32>
    %24 = vector.broadcast %11 : vector<1x32xf32> to vector<8x32xf32>
    %25 = arith.addf %23, %24 : vector<8x32xf32>
    %cst_22 = arith.constant 0.000000e+00 : f32
    %26 = vector.broadcast %cst_22 : f32 to vector<8x32xf32>
    %27 = arith.maximumf %25, %26 : vector<8x32xf32>
    %cst_23 = arith.constant dense<0.000000e+00> : vector<8x32xf32>
    %28 = tpu.matmul %27, %7, %cst_23 {dimension_numbers = #tpu.dot_dimension_numbers<[1], [0], [0], [1], [0, 0, 1, 1], [], []>} : vector<8x32xf32>, vector<32x32xf32>, vector<8x32xf32> -> vector<8x32xf32>
    %29 = vector.broadcast %13 : vector<1x32xf32> to vector<8x32xf32>
    %30 = arith.addf %28, %29 : vector<8x32xf32>
    %31 = vector.extract_strided_slice %30 {offsets = [0, 0], sizes = [8, 1], strides = [1, 1]} : vector<8x32xf32> to vector<8x1xf32>
    %c0_24 = arith.constant 0 : index
    %c0_25 = arith.constant 0 : index
    %32 = vector.load %arg4[%c0_24, %c0_25] : memref<8x1xf32, #tpu.memory_space<vmem>>, vector<8x1xf32>
    tpu.vector_store %arg4[%c0_24, %c0_25], %31 {strides = array<i32>} : memref<8x1xf32, #tpu.memory_space<vmem>>, vector<8x1xf32>,
    return
  }
}

</mosaic_0001>

<llo_original>
// kernel: critic_forward.1
$region0: #{critic_forward.1}
  #allocation0 [shape = 'u32[]', space=smem, size = 0x4, offset = 0x4, fixed_abs, tag = 'smem constant byte address 0x4 - core index']
  #allocation1 [shape = 'u32[144,128]{1,0:T(1,128)}', space=vmem, size = 0x12000, scoped, tag = 'internal scratch']
  %s0 = inlined_call_operand.vmem [shape: f32[8,16], index: 0, kind: input, shape index: {}]
  %s1 = inlined_call_operand.vmem [shape: f32[8,4], index: 1, kind: input, shape index: {}]
  %s2 = inlined_call_operand.hbm [shape: f32[3,32,32], index: 2, kind: input, shape index: {}]
  %s3 = inlined_call_operand.vmem [shape: f32[3,1,32], index: 3, kind: input, shape index: {}]
  %s4 = inlined_call_operand.vmem [shape: f32[8,1], index: 4, kind: output, shape index: {}]
  %s5 = sld [smem:[#allocation0]]
  $region30: #{critic_forward.1} parent=0
    _
  %s7 = ssub.s32 1, %s5
  %s8 = scalar_select 0, %s7, %s5
  $region1: #{critic_forward.1} parent=0
    #allocation2 [shape = 'u8[49152]{0}', space=vmem, size = 0xc000, scoped, tag = 'input window, operand 2, single buffered']
    #allocation3 [shape = 's32[1]{0}', space=sflag, size = 0x4, scoped, tag = 'scoped memory for critic_forward.1']
    %9 = vsyncpa [#allocation3], 0
    // Predicated region
    $region2: #{critic_forward.1} parent=1 // pred_check
      _
    $region3: #{critic_forward.1} parent=1 // pred_check_branch
      %11 = sbr.rel (0) target = $region5
    $region4: #{critic_forward.1} parent=1 // pred_region
      _
    $region5: #{critic_forward.1} parent=1 // pred_fallthru
      _
    // Predicated region
    $region6: #{critic_forward.1} parent=1 // pred_check
      _
    $region7: #{critic_forward.1} parent=1 // pred_check_branch
      %13 = sbr.rel (0) target = $region9
    $region8: #{critic_forward.1} parent=1 // pred_region
      _
    $region9: #{critic_forward.1} parent=1 // pred_fallthru
      _
    // Predicated region
    $region10: #{critic_forward.1} parent=1 // pred_check
      _
    $region11: #{critic_forward.1} parent=1 // pred_check_branch
      %15 = sbr.rel (0) target = $region13
    $region12: #{critic_forward.1} parent=1 // pred_region
      %s17 = ssub.s32 1536, 1536
      %18 = vsyncadd [#allocation3], %s17
      %s19 = sshll.u32 [#allocation2], 4
      %s20 = int_to_ptr.vmem [resolvable:$true] %s19
      %25 = dma.hbm_to_vmem [thread:$0]  %s2, 1536, %s20, [#allocation3], 128, 128, 8
    $region13: #{critic_forward.1} parent=1 // pred_fallthru
      _
    // Predicated region
    $region14: #{critic_forward.1} parent=1 // pred_check
      _
    $region15: #{critic_forward.1} parent=1 // pred_check_branch
      %27 = sbr.rel (0) target = $region17
    $region16: #{critic_forward.1} parent=1 // pred_region
      _
    $region17: #{critic_forward.1} parent=1 // pred_fallthru
      _
    // Predicated region
    $region18: #{critic_forward.1} parent=1 // pred_check
      _
    $region19: #{critic_forward.1} parent=1 // pred_check_branch
      %29 = sbr.rel (0) target = $region21
    $region20: #{critic_forward.1} parent=1 // pred_region
      %30 = dma.done [#allocation3], 1536
    $region21: #{critic_forward.1} parent=1 // pred_fallthru
      _
    %v31 = vld [vmem:[%s0] sm:$0xff]
    %v32 = vld [vmem:[%s1] sm:$0xff]
    %v33 = vld [vmem:[#allocation2] sm:$0xff]
    %v34 = vld [vmem:[#allocation2 + $0x8] sm:$0xff]
    %v35 = vld [vmem:[#allocation2 + $0x10] sm:$0xff]
    %s36 = scalar_lea.vmem [#allocation2], 32
    %v37 = vld [vmem:[%s36] sm:$0xff]
    %v38 = vld [vmem:[%s36 + $0x8] sm:$0xff]
    %v39 = vld [vmem:[%s36 + $0x10] sm:$0xff]
    %v40 = vld [vmem:[%s36 + $0x18] sm:$0xff]
    %s41 = scalar_lea.vmem [#allocation2], 64
    %v42 = vld [vmem:[%s41] sm:$0xff]
    %v43 = vld [vmem:[%s41 + $0x8] sm:$0xff]
    %v44 = vld [vmem:[%s41 + $0x10] sm:$0xff]
    %v45 = vld [vmem:[%s41 + $0x18] sm:$0xff]
    %v46 = vld [vmem:[%s3] sm:$0x1]
    %s47 = scalar_lea.vmem %s3, 1
    %v48 = vld [vmem:[%s47] sm:$0x1]
    %s49 = scalar_lea.vmem %s3, 2
    %v50 = vld [vmem:[%s49] sm:$0x1]
    %vm51 = vcmask 31744
    %v53 = vsel %vm51, %v32, 0
    %vm55 = vcmask 1043456
    %v57 = vsel %vm55, %v35, 0
    %59 = vmatprep.subr.mxu0 0.0
    %60 = vmatpush1.msra.mxu0 %v57
    %61 = vmatprep.subr.mxu0 0.0
    %62 = vmatpush1.msra.mxu0 0.0
    %63 = vmatprep.subr.mxu0 0.0
    %64 = vmatpush1.msra.mxu0 0.0
    %65 = vmatprep.subr.mxu0 0.0
    %66 = vmatpush1.msra.mxu0 0.0
    %67 = vmatprep.subr.mxu0 0.0
    %68 = vmatpush1.msra.mxu0 0.0
    %69 = vmatprep.subr.mxu0 0.0
    %70 = vmatpush1.msra.mxu0 0.0
    %71 = vmatprep.subr.mxu0 0.0
    %72 = vmatpush1.msra.mxu0 0.0
    %73 = vmatprep.subr.mxu0 0.0
    %74 = vmatpush1.msra.mxu0 0.0
    %75 = vmatprep.subr.mxu0 0.0
    %76 = vmatpush1.msra.mxu0 0.0
    %77 = vmatprep.subr.mxu0 0.0
    %78 = vmatpush1.msra.mxu0 0.0
    %79 = vmatprep.subr.mxu0 0.0
    %80 = vmatpush1.msra.mxu0 0.0
    %81 = vmatprep.subr.mxu0 0.0
    %82 = vmatpush1.msra.mxu0 0.0
    %83 = vmatprep.subr.mxu0 0.0
    %84 = vmatpush1.msra.mxu0 0.0
    %85 = vmatprep.subr.mxu0 0.0
    %86 = vmatpush1.msra.mxu0 0.0
    %87 = vmatprep.subr.mxu0 0.0
    %88 = vmatpush1.msra.mxu0 0.0
    %89 = vmatprep.subr.mxu0 0.0
    %90 = vmatpush1.msra.mxu0 0.0
    %91 = vmatprep.subr.mxu0 0.0
    %92 = vmatpush1.msra.mxu0 0.0
    %93 = vmatprep.subr.mxu0 0.0
    %94 = vmatpush1.msra.mxu0 0.0
    %95 = vmatprep.subr.mxu0 0.0
    %96 = vmatpush1.msra.mxu0 0.0
    %97 = vmatprep.subr.mxu0 0.0
    %98 = vmatpush1.msra.mxu0 0.0
    %99 = vmatprep.subr.mxu0 0.0
    %100 = vmatpush1.msra.mxu0 0.0
    %101 = vmatprep.subr.mxu0 0.0
    %102 = vmatpush1.msra.mxu0 0.0
    %103 = vmatprep.subr.mxu0 0.0
    %104 = vmatpush1.msra.mxu0 0.0
    %105 = vmatprep.subr.mxu0 0.0
    %106 = vmatpush1.msra.mxu0 0.0
    %107 = vmatprep.subr.mxu0 0.0
    %108 = vmatpush1.msra.mxu0 0.0
    %109 = vmatprep.subr.mxu0 0.0
    %110 = vmatpush1.msra.mxu0 0.0
    %111 = vmatprep.subr.mxu0 0.0
    %112 = vmatpush1.msra.mxu0 0.0
    %113 = vmatprep.subr.mxu0 0.0
    %114 = vmatpush1.msra.mxu0 0.0
    %115 = vmatprep.subr.mxu0 0.0
    %116 = vmatpush1.msra.mxu0 0.0
    %117 = vmatprep.subr.mxu0 0.0
    %118 = vmatpush1.msra.mxu0 0.0
    %119 = vmatprep.subr.mxu0 0.0
    %120 = vmatpush1.msra.mxu0 0.0
    %121 = vmatprep.subr.mxu0 0.0
    %122 = vmatpush1.msra.mxu0 0.0
    %123 = vmatprep.mubr.f32.mxu0 0.0
    %124 = vmatmul.mubr.f32.gmra.mrb[0].mxu0 %v53
    %v125 = vpop.f32.mrb[0].mxu0
    %v126 = vadd.f32 0.0, %v125
    %v127 = vpop.f32.mrb[0].mxu0
    %128 = vdwg.mxu0
    %vm129 = vcmask 130048
    %v131 = vsel %vm129, %v31, 0
    %133 = vmatprep.subr.mxu0 0.0
    %134 = vmatpush1.msra.mxu0 %v33
    %135 = vmatprep.subr.mxu0 0.0
    %136 = vmatpush1.msra.mxu0 %v34
    %137 = vmatprep.subr.mxu0 0.0
    %138 = vmatpush1.msra.mxu0 0.0
    %139 = vmatprep.subr.mxu0 0.0
    %140 = vmatpush1.msra.mxu0 0.0
    %141 = vmatprep.subr.mxu0 0.0
    %142 = vmatpush1.msra.mxu0 0.0
    %143 = vmatprep.subr.mxu0 0.0
    %144 = vmatpush1.msra.mxu0 0.0
    %145 = vmatprep.subr.mxu0 0.0
    %146 = vmatpush1.msra.mxu0 0.0
    %147 = vmatprep.subr.mxu0 0.0
    %148 = vmatpush1.msra.mxu0 0.0
    %149 = vmatprep.subr.mxu0 0.0
    %150 = vmatpush1.msra.mxu0 0.0
    %151 = vmatprep.subr.mxu0 0.0
    %152 = vmatpush1.msra.mxu0 0.0
    %153 = vmatprep.subr.mxu0 0.0
    %154 = vmatpush1.msra.mxu0 0.0
    %155 = vmatprep.subr.mxu0 0.0
    %156 = vmatpush1.msra.mxu0 0.0
    %157 = vmatprep.subr.mxu0 0.0
    %158 = vmatpush1.msra.mxu0 0.0
    %159 = vmatprep.subr.mxu0 0.0
    %160 = vmatpush1.msra.mxu0 0.0
    %161 = vmatprep.subr.mxu0 0.0
    %162 = vmatpush1.msra.mxu0 0.0
    %163 = vmatprep.subr.mxu0 0.0
    %164 = vmatpush1.msra.mxu0 0.0
    %165 = vmatprep.subr.mxu0 0.0
    %166 = vmatpush1.msra.mxu0 0.0
    %167 = vmatprep.subr.mxu0 0.0
    %168 = vmatpush1.msra.mxu0 0.0
    %169 = vmatprep.subr.mxu0 0.0
    %170 = vmatpush1.msra.mxu0 0.0
    %171 = vmatprep.subr.mxu0 0.0
    %172 = vmatpush1.msra.mxu0 0.0
    %173 = vmatprep.subr.mxu0 0.0
    %174 = vmatpush1.msra.mxu0 0.0
    %175 = vmatprep.subr.mxu0 0.0
    %176 = vmatpush1.msra.mxu0 0.0
    %177 = vmatprep.subr.mxu0 0.0
    %178 = vmatpush1.msra.mxu0 0.0
    %179 = vmatprep.subr.mxu0 0.0
    %180 = vmatpush1.msra.mxu0 0.0
    %181 = vmatprep.subr.mxu0 0.0
    %182 = vmatpush1.msra.mxu0 0.0
    %183 = vmatprep.subr.mxu0 0.0
    %184 = vmatpush1.msra.mxu0 0.0
    %185 = vmatprep.subr.mxu0 0.0
    %186 = vmatpush1.msra.mxu0 0.0
    %187 = vmatprep.subr.mxu0 0.0
    %188 = vmatpush1.msra.mxu0 0.0
    %189 = vmatprep.subr.mxu0 0.0
    %190 = vmatpush1.msra.mxu0 0.0
    %191 = vmatprep.subr.mxu0 0.0
    %192 = vmatpush1.msra.mxu0 0.0
    %193 = vmatprep.subr.mxu0 0.0
    %194 = vmatpush1.msra.mxu0 0.0
    %195 = vmatprep.subr.mxu0 0.0
    %196 = vmatpush1.msra.mxu0 0.0
    %197 = vmatprep.mubr.f32.mxu0 0.0
    %198 = vmatmul.mubr.f32.gmra.mrb[0].mxu0 %v131
    %v199 = vpop.f32.mrb[0].mxu0
    %v200 = vadd.f32 %v126, %v199
    %v201 = vpop.f32.mrb[0].mxu0
    %202 = vdwg.mxu0
    %v204 = vlaneseq
    %v205 = vshrl.u32 %v204, 7
    %v206 = vsub.s32 0, %v205
    %v207 = vrot.slane %v46, %v206
    %v209 = vadd.f32 %v200, %v207
    %v210 = vmax.f32 %v209, 0.0
    %v212 = vlaneseq
    %v213 = vshrl.u32 %v212, 7
    %v214 = vsub.s32 0, %v213
    %v215 = vrot.slane %v48, %v214
    %vm217 = vcmask 261120
    %v219 = vsel %vm217, %v210, 0
    %221 = vmatprep.subr.mxu0 0.0
    %222 = vmatpush1.msra.mxu0 %v37
    %223 = vmatprep.subr.mxu0 0.0
    %224 = vmatpush1.msra.mxu0 %v38
    %225 = vmatprep.subr.mxu0 0.0
    %226 = vmatpush1.msra.mxu0 %v39
    %227 = vmatprep.subr.mxu0 0.0
    %228 = vmatpush1.msra.mxu0 %v40
    %229 = vmatprep.subr.mxu0 0.0
    %230 = vmatpush1.msra.mxu0 0.0
    %231 = vmatprep.subr.mxu0 0.0
    %232 = vmatpush1.msra.mxu0 0.0
    %233 = vmatprep.subr.mxu0 0.0
    %234 = vmatpush1.msra.mxu0 0.0
    %235 = vmatprep.subr.mxu0 0.0
    %236 = vmatpush1.msra.mxu0 0.0
    %237 = vmatprep.subr.mxu0 0.0
    %238 = vmatpush1.msra.mxu0 0.0
    %239 = vmatprep.subr.mxu0 0.0
    %240 = vmatpush1.msra.mxu0 0.0
    %241 = vmatprep.subr.mxu0 0.0
    %242 = vmatpush1.msra.mxu0 0.0
    %243 = vmatprep.subr.mxu0 0.0
    %244 = vmatpush1.msra.mxu0 0.0
    %245 = vmatprep.subr.mxu0 0.0
    %246 = vmatpush1.msra.mxu0 0.0
    %247 = vmatprep.subr.mxu0 0.0
    %248 = vmatpush1.msra.mxu0 0.0
    %249 = vmatprep.subr.mxu0 0.0
    %250 = vmatpush1.msra.mxu0 0.0
    %251 = vmatprep.subr.mxu0 0.0
    %252 = vmatpush1.msra.mxu0 0.0
    %253 = vmatprep.subr.mxu0 0.0
    %254 = vmatpush1.msra.mxu0 0.0
    %255 = vmatprep.subr.mxu0 0.0
    %256 = vmatpush1.msra.mxu0 0.0
    %257 = vmatprep.subr.mxu0 0.0
    %258 = vmatpush1.msra.mxu0 0.0
    %259 = vmatprep.subr.mxu0 0.0
    %260 = vmatpush1.msra.mxu0 0.0
    %261 = vmatprep.subr.mxu0 0.0
    %262 = vmatpush1.msra.mxu0 0.0
    %263 = vmatprep.subr.mxu0 0.0
    %264 = vmatpush1.msra.mxu0 0.0
    %265 = vmatprep.subr.mxu0 0.0
    %266 = vmatpush1.msra.mxu0 0.0
    %267 = vmatprep.subr.mxu0 0.0
    %268 = vmatpush1.msra.mxu0 0.0
    %269 = vmatprep.subr.mxu0 0.0
    %270 = vmatpush1.msra.mxu0 0.0
    %271 = vmatprep.subr.mxu0 0.0
    %272 = vmatpush1.msra.mxu0 0.0
    %273 = vmatprep.subr.mxu0 0.0
    %274 = vmatpush1.msra.mxu0 0.0
    %275 = vmatprep.subr.mxu0 0.0
    %276 = vmatpush1.msra.mxu0 0.0
    %277 = vmatprep.subr.mxu0 0.0
    %278 = vmatpush1.msra.mxu0 0.0
    %279 = vmatprep.subr.mxu0 0.0
    %280 = vmatpush1.msra.mxu0 0.0
    %281 = vmatprep.subr.mxu0 0.0
    %282 = vmatpush1.msra.mxu0 0.0
    %283 = vmatprep.subr.mxu0 0.0
    %284 = vmatpush1.msra.mxu0 0.0
    %285 = vmatprep.mubr.f32.mxu0 0.0
    %286 = vmatmul.mubr.f32.gmra.mrb[0].mxu0 %v219
    %v287 = vpop.f32.mrb[0].mxu0
    %v288 = vadd.f32 %v215, %v287
    %v289 = vpop.f32.mrb[0].mxu0
    %290 = vdwg.mxu0
    %v291 = vmax.f32 %v288, 0.0
    %v293 = vlaneseq
    %v294 = vshrl.u32 %v293, 7
    %v295 = vsub.s32 0, %v294
    %v296 = vrot.slane %v50, %v295
    %v299 = vsel %vm217, %v291, 0
    %301 = vmatprep.subr.mxu0 0.0
    %302 = vmatpush1.msra.mxu0 %v42
    %303 = vmatprep.subr.mxu0 0.0
    %304 = vmatpush1.msra.mxu0 %v43
    %305 = vmatprep.subr.mxu0 0.0
    %306 = vmatpush1.msra.mxu0 %v44
    %307 = vmatprep.subr.mxu0 0.0
    %308 = vmatpush1.msra.mxu0 %v45
    %309 = vmatprep.subr.mxu0 0.0
    %310 = vmatpush1.msra.mxu0 0.0
    %311 = vmatprep.subr.mxu0 0.0
    %312 = vmatpush1.msra.mxu0 0.0
    %313 = vmatprep.subr.mxu0 0.0
    %314 = vmatpush1.msra.mxu0 0.0
    %315 = vmatprep.subr.mxu0 0.0
    %316 = vmatpush1.msra.mxu0 0.0
    %317 = vmatprep.subr.mxu0 0.0
    %318 = vmatpush1.msra.mxu0 0.0
    %319 = vmatprep.subr.mxu0 0.0
    %320 = vmatpush1.msra.mxu0 0.0
    %321 = vmatprep.subr.mxu0 0.0
    %322 = vmatpush1.msra.mxu0 0.0
    %323 = vmatprep.subr.mxu0 0.0
    %324 = vmatpush1.msra.mxu0 0.0
    %325 = vmatprep.subr.mxu0 0.0
    %326 = vmatpush1.msra.mxu0 0.0
    %327 = vmatprep.subr.mxu0 0.0
    %328 = vmatpush1.msra.mxu0 0.0
    %329 = vmatprep.subr.mxu0 0.0
    %330 = vmatpush1.msra.mxu0 0.0
    %331 = vmatprep.subr.mxu0 0.0
    %332 = vmatpush1.msra.mxu0 0.0
    %333 = vmatprep.subr.mxu0 0.0
    %334 = vmatpush1.msra.mxu0 0.0
    %335 = vmatprep.subr.mxu0 0.0
    %336 = vmatpush1.msra.mxu0 0.0
    %337 = vmatprep.subr.mxu0 0.0
    %338 = vmatpush1.msra.mxu0 0.0
    %339 = vmatprep.subr.mxu0 0.0
    %340 = vmatpush1.msra.mxu0 0.0
    %341 = vmatprep.subr.mxu0 0.0
    %342 = vmatpush1.msra.mxu0 0.0
    %343 = vmatprep.subr.mxu0 0.0
    %344 = vmatpush1.msra.mxu0 0.0
    %345 = vmatprep.subr.mxu0 0.0
    %346 = vmatpush1.msra.mxu0 0.0
    %347 = vmatprep.subr.mxu0 0.0
    %348 = vmatpush1.msra.mxu0 0.0
    %349 = vmatprep.subr.mxu0 0.0
    %350 = vmatpush1.msra.mxu0 0.0
    %351 = vmatprep.subr.mxu0 0.0
    %352 = vmatpush1.msra.mxu0 0.0
    %353 = vmatprep.subr.mxu0 0.0
    %354 = vmatpush1.msra.mxu0 0.0
    %355 = vmatprep.subr.mxu0 0.0
    %356 = vmatpush1.msra.mxu0 0.0
    %357 = vmatprep.subr.mxu0 0.0
    %358 = vmatpush1.msra.mxu0 0.0
    %359 = vmatprep.subr.mxu0 0.0
    %360 = vmatpush1.msra.mxu0 0.0
    %361 = vmatprep.subr.mxu0 0.0
    %362 = vmatpush1.msra.mxu0 0.0
    %363 = vmatprep.subr.mxu0 0.0
    %364 = vmatpush1.msra.mxu0 0.0
    %365 = vmatprep.mubr.f32.mxu0 0.0
    %366 = vmatmul.mubr.f32.gmra.mrb[0].mxu0 %v299
    %v367 = vpop.f32.mrb[0].mxu0
    %v368 = vadd.f32 %v296, %v367
    %v369 = vpop.f32.mrb[0].mxu0
    %370 = vdwg.mxu0
    %vm371 = vcmask 7168
    %372 = vst.msk [vmem:[%s4] sm:$0xff] %vm371, %v368
    // Predicated region
    $region22: #{critic_forward.1} parent=1 // pred_check
      _
    $region23: #{critic_forward.1} parent=1 // pred_check_branch
      %374 = sbr.rel (0) target = $region25
    $region24: #{critic_forward.1} parent=1 // pred_region
      _
    $region25: #{critic_forward.1} parent=1 // pred_fallthru
      _
    // Predicated region
    $region26: #{critic_forward.1} parent=1 // pred_check
      _
    $region27: #{critic_forward.1} parent=1 // pred_check_branch
      %376 = sbr.rel (0) target = $region29
    $region28: #{critic_forward.1} parent=1 // pred_region
      _
    $region29: #{critic_forward.1} parent=1 // pred_fallthru
      _
    %377 = vsyncpa [#allocation3], 1

</llo_original>
